<compile_context>
chip_gen: v5e
topology: v5e:2x2
jax: 0.10.0
libtpu: 0.0.40
codegen_flags: <defaults>
</compile_context>

<pallas_src>
import functools

import jax
import jax.numpy as jnp
from jax.experimental import pallas as pl
from jax.experimental.pallas import tpu as pltpu

LANE = 128
SCORE_W = 128   # lane-dense score buffer width (cols 0:heads = src, heads:2h = dst)


def _round_up(v, m):
    return -(-v // m) * m


def _full_spec(arr):
    shape = arr.shape
    zeros = (0,) * len(shape)
    return pl.BlockSpec(shape, lambda i, _z=zeros: _z)


def _vmem_limit(block_bytes, temp_bytes):
    est = 2 * block_bytes + temp_bytes + (8 << 20)   # 2x for pipeline double-buffers
    return int(min(max(est, 32 << 20), 64 << 20))    # 64 MiB cap is safe on all gens


# ---------------------------------------------------------------------------
# Kernel 1: hoisted projection — h = x @ W (bf16 out) and fused attention
# scores s = x @ [W·a_src | W·a_dst | 0...] for all heads, row-tiled over nodes.
# ---------------------------------------------------------------------------
def _gat_project_kernel(x_ref, w_ref, wa_ref, h_ref, s_ref):
    xb = x_ref[...].astype(jnp.bfloat16)
    h = jnp.dot(xb, w_ref[...], preferred_element_type=jnp.float32)
    h_ref[...] = h.astype(jnp.bfloat16)                               # lane-dense bf16
    s_ref[...] = jnp.dot(xb, wa_ref[...], preferred_element_type=jnp.float32)


def _project_pallas(x_pad, w_p, wa_p, *, tile_rows):
    n_pad, f_in = x_pad.shape
    h_width = w_p.shape[1]
    blk_bytes = (tile_rows * f_in * x_pad.dtype.itemsize
                 + w_p.size * 2 + wa_p.size * 2
                 + tile_rows * (h_width * 2 + SCORE_W * 4))
    return pl.pallas_call(
        _gat_project_kernel,
        out_shape=(jax.ShapeDtypeStruct((n_pad, h_width), jnp.bfloat16),
                   jax.ShapeDtypeStruct((n_pad, SCORE_W), jnp.float32)),
        grid=(n_pad // tile_rows,),
        in_specs=[
            pl.BlockSpec((tile_rows, f_in), lambda i: (i, 0)),   # node-feature row tile
            _full_spec(w_p),                                     # resident weights (bf16)
            _full_spec(wa_p),                                    # resident folded att (bf16)
        ],
        out_specs=(pl.BlockSpec((tile_rows, h_width), lambda i: (i, 0)),
                   pl.BlockSpec((tile_rows, SCORE_W), lambda i: (i, 0))),
        compiler_params=pltpu.CompilerParams(
            dimension_semantics=("parallel",),
            vmem_limit_bytes=_vmem_limit(blk_bytes, 2 * tile_rows * h_width * 4)),
    )(x_pad, w_p, wa_p)


# ---------------------------------------------------------------------------
# Kernel 2: masked-softmax attention + attn@h over a tile of target rows.
# ---------------------------------------------------------------------------
def _gat_attn_kernel(h_ref, ssrc_ref, sdst_ref, adj_ref, b_ref, o_ref, *,
                     heads, out_c, mean_heads, apply_elu):
    """out_c is the lane-padded per-head width (multiple of 128)."""
    mask = adj_ref[...] != 0                         # [TILE, N_pad] int8 compare, no cast
    s_dst = sdst_ref[...]                            # [TILE, heads]  f32
    s_src = ssrc_ref[...]                            # [heads, N_pad] f32
    neg = jnp.float32(-1e30)

    def head_out(hd):
        e = s_dst[:, hd:hd + 1] + s_src[hd:hd + 1, :]          # [TILE, N_pad]
        e = jnp.where(e >= 0, e, 0.2 * e)                      # LeakyReLU(0.2)
        e = jnp.where(mask, e, neg)                            # single masking step
        m = jnp.max(e, axis=1, keepdims=True)                  # per-target softmax (f32)
        p = jnp.exp(e - m)                                     # non-edges underflow to 0
        rs = jnp.sum(p, axis=1, keepdims=True)                 # [TILE, 1]
        o_hd = jnp.dot(p.astype(jnp.bfloat16),
                       h_ref[:, hd * out_c:(hd + 1) * out_c],  # bf16 resident slice
                       preferred_element_type=jnp.float32)     # [TILE, out_c]
        # normalize after the matmul: [TILE,128] multiply + EUP reciprocal
        return o_hd * pl.reciprocal(rs, approx=True)

    def elu(v):
        return jnp.where(v > 0, v, jnp.exp(jnp.minimum(v, 0.0)) - 1.0)

    if mean_heads:
        acc = head_out(0)
        for hd in range(1, heads):
            acc = acc + head_out(hd)
        out = acc * jnp.float32(1.0 / heads) + b_ref[...]
        if apply_elu:
            out = elu(out)
        o_ref[...] = out.astype(o_ref.dtype)                   # lane-dense store
    else:
        for hd in range(heads):                                # write lane slices directly
            o_hd = head_out(hd) + b_ref[:, hd * out_c:(hd + 1) * out_c]
            if apply_elu:
                o_hd = elu(o_hd)
            o_ref[:, hd * out_c:(hd + 1) * out_c] = o_hd.astype(o_ref.dtype)


def _attn_pallas(h_all, s_srcT, s_dst, adj_i8, b_p, *, heads, out_c_pad,
                 mean_heads, apply_elu, tile_rows, out_dtype):
    n_pad = h_all.shape[0]
    out_width = out_c_pad if mean_heads else heads * out_c_pad

    kernel = functools.partial(_gat_attn_kernel, heads=heads, out_c=out_c_pad,
                               mean_heads=mean_heads, apply_elu=apply_elu)

    blk_bytes = (h_all.size * 2 + s_srcT.size * 4 + b_p.size * 4
                 + tile_rows * n_pad                                   # int8 adjacency tile
                 + tile_rows * heads * 4
                 + tile_rows * out_width * jnp.dtype(out_dtype).itemsize)
    tmp_bytes = 6 * tile_rows * n_pad * 4                              # e/p/mask temporaries

    return pl.pallas_call(
        kernel,
        out_shape=jax.ShapeDtypeStruct((n_pad, out_width), out_dtype),
        grid=(n_pad // tile_rows,),
        in_specs=[
            _full_spec(h_all),                                    # resident projected feats (bf16)
            _full_spec(s_srcT),                                   # resident source scores [heads,N]
            pl.BlockSpec((tile_rows, heads), lambda i: (i, 0)),   # target (dst) scores tile
            pl.BlockSpec((tile_rows, n_pad), lambda i: (i, 0)),   # adjacency row tile (int8)
            _full_spec(b_p),                                      # bias
        ],
        out_specs=pl.BlockSpec((tile_rows, out_width), lambda i: (i, 0)),
        compiler_params=pltpu.CompilerParams(
            dimension_semantics=("parallel",),
            vmem_limit_bytes=_vmem_limit(blk_bytes, tmp_bytes)),
    )(h_all, s_srcT, s_dst, adj_i8, b_p)


# ---------------------------------------------------------------------------
# Wrapper: parameter padding / att folding + one full GATConv layer.
# ---------------------------------------------------------------------------
def _pad_gat_params(w, att_src, att_dst, bias, heads, out_c, out_c_pad, concat):
    """Zero-pad each head's output channels to out_c_pad, fold att vectors into
    the weights (W·a per head), and pad the bias to the output layout."""
    f_in = w.shape[0]
    w_p = jnp.zeros((f_in, heads * out_c_pad), jnp.float32)
    wa = jnp.zeros((f_in, SCORE_W), jnp.float32)
    for h in range(heads):
        w_h = w[:, h * out_c:(h + 1) * out_c]
        w_p = w_p.at[:, h * out_c_pad:h * out_c_pad + out_c].set(w_h)
        wa = wa.at[:, h].set(w_h @ att_src[h])                 # folded source score vec
        wa = wa.at[:, heads + h].set(w_h @ att_dst[h])         # folded target score vec
    if concat:
        b_p = jnp.zeros((1, heads * out_c_pad), jnp.float32)
        for h in range(heads):
            b_p = b_p.at[0, h * out_c_pad:h * out_c_pad + out_c].set(
                bias[0, h * out_c:(h + 1) * out_c])
    else:
        b_p = jnp.zeros((1, out_c_pad), jnp.float32).at[0, :out_c].set(bias[0])
    return w_p.astype(jnp.bfloat16), wa.astype(jnp.bfloat16), b_p


def _gat_conv(x_pad, adj_i8, w, att_src, att_dst, bias, *, heads, out_c,
              mean_heads, apply_elu, tile_rows, out_dtype):
    out_c_pad = _round_up(out_c, LANE)
    w_p, wa_p, b_p = _pad_gat_params(w, att_src, att_dst, bias, heads, out_c,
                                     out_c_pad, concat=not mean_heads)
    # Hoisted projection: h (bf16) + fused scores, computed once per layer.
    h_all, scores = _project_pallas(x_pad, w_p, wa_p, tile_rows=tile_rows)
    s_srcT = jnp.transpose(scores[:, :heads])        # [heads, N_pad] resident input
    s_dst = scores[:, heads:2 * heads]               # [N_pad, heads] row-tiled input
    return _attn_pallas(h_all, s_srcT, s_dst, adj_i8, b_p, heads=heads,
                        out_c_pad=out_c_pad, mean_heads=mean_heads,
                        apply_elu=apply_elu, tile_rows=tile_rows,
                        out_dtype=out_dtype)


def gat_encoder_forward(x, edge_index, params, hid_dim, lat_dim, heads1=4,
                        tile_rows=256):
    n, in_dim = x.shape
    n_pad = _round_up(n, tile_rows)

    # Dense adjacency mask as int8 (adj[i, j] = 1 iff edge j -> i), self loops
    # for the real nodes only (padded rows/cols stay empty and are sliced off).
    src, dst = edge_index[0], edge_index[1]
    adj = jnp.zeros((n_pad, n_pad), jnp.int8).at[dst, src].set(1)
    idx = jnp.arange(n)
    adj = adj.at[idx, idx].set(1)

    x_p = jnp.zeros((n_pad, in_dim), jnp.float32).at[:n, :].set(x)

    hid_pad = _round_up(hid_dim, LANE)
    out2 = 2 * lat_dim

    # gat1: GATConv(in_dim, hid_dim, heads=4, concat=False) + ELU, bf16 output
    # (only ever consumed as a bf16 MXU operand by gat2).
    h1 = _gat_conv(x_p, adj, params["w1"], params["att_src1"], params["att_dst1"],
                   params["b1"], heads=heads1, out_c=hid_dim, mean_heads=True,
                   apply_elu=True, tile_rows=tile_rows, out_dtype=jnp.bfloat16)

    # gat2: GATConv(hid_dim, 2*lat_dim, heads=1); its input is the hid_pad-wide
    # h1, so pad the weight's input rows as well.
    w2_rows = jnp.zeros((hid_pad, out2), jnp.float32).at[:hid_dim, :].set(params["w2"])
    out = _gat_conv(h1, adj, w2_rows, params["att_src2"], params["att_dst2"],
                    params["b2"], heads=1, out_c=out2, mean_heads=False,
                    apply_elu=False, tile_rows=tile_rows, out_dtype=jnp.float32)

    out = out[:n, :out2]                      # fused, lane-dense result; chunk here
    return out[:, :lat_dim], out[:, lat_dim:]


# ---------------------------------------------------------------------------
# Pure-JAX reference (f32, same PyG semantics) for the sanity check.
# ---------------------------------------------------------------------------
def _gat_layer_ref(x, adj, w, att_src, att_dst, bias, heads, out_c, concat):
    h = jnp.dot(x, w)
    outs, acc = [], None
    for hd in range(heads):
        h_hd = h[:, hd * out_c:(hd + 1) * out_c]
        s_dst = jnp.sum(h_hd * att_dst[hd:hd + 1, :], axis=1, keepdims=True)    # [N,1]
        s_src = jnp.sum(h_hd * att_src[hd:hd + 1, :], axis=1, keepdims=True).T  # [1,N]
        e = s_dst + s_src
        e = jnp.where(e >= 0, e, 0.2 * e)
        e = jnp.where(adj > 0, e, -1e30)
        m = jnp.max(e, axis=1, keepdims=True)
        p = jnp.exp(e - m) * adj
        attn = p / jnp.sum(p, axis=1, keepdims=True)
        o = jnp.dot(attn, h_hd)
        if concat:
            outs.append(o)
        else:
            acc = o if acc is None else acc + o
    out = jnp.concatenate(outs, axis=-1) if concat else acc / float(heads)
    return out + bias


def reference_forward(x, adj, params, hid_dim, lat_dim, heads1=4):
    h = _gat_layer_ref(x, adj, params["w1"], params["att_src1"], params["att_dst1"],
                       params["b1"], heads=heads1, out_c=hid_dim, concat=False)
    h = jnp.where(h > 0, h, jnp.exp(jnp.minimum(h, 0.0)) - 1.0)
    out = _gat_layer_ref(h, adj, params["w2"], params["att_src2"], params["att_dst2"],
                         params["b2"], heads=1, out_c=2 * lat_dim, concat=True)
    return out[:, :lat_dim], out[:, lat_dim:]


def init_params(key, in_dim, hid_dim, lat_dim, heads1=4):
    ks = jax.random.split(key, 6)

    def g(k, shape):
        return jax.random.normal(k, shape, jnp.float32) * 0.1

    return {
        "w1": g(ks[0], (in_dim, heads1 * hid_dim)),
        "att_src1": g(ks[1], (heads1, hid_dim)),
        "att_dst1": g(ks[2], (heads1, hid_dim)),
        "b1": jnp.zeros((1, hid_dim), jnp.float32),
        "w2": g(ks[3], (hid_dim, 2 * lat_dim)),
        "att_src2": g(ks[4], (1, 2 * lat_dim)),
        "att_dst2": g(ks[5], (1, 2 * lat_dim)),
        "b2": jnp.zeros((1, 2 * lat_dim), jnp.float32),
    }


if __name__ == "__main__":
    key = jax.random.PRNGKey(0)
    N, in_dim, hid_dim, lat_dim, heads1 = 8, 8, 16, 8, 4

    kx, kp = jax.random.split(key)
    x = jax.random.normal(kx, (N, in_dim), jnp.float32)

    # deterministic bidirectional ring graph
    s = jnp.arange(N)
    src = jnp.concatenate([s, (s + 1) % N])
    dst = jnp.concatenate([(s + 1) % N, s])
    edge_index = jnp.stack([src, dst], axis=0).astype(jnp.int32)

    params = init_params(kp, in_dim, hid_dim, lat_dim, heads1)

    mu, logstd = gat_encoder_forward(x, edge_index, params, hid_dim, lat_dim, heads1)
    jax.block_until_ready((mu, logstd))

    # sanity check vs pure-f32 reference (kernel uses bf16 MXU operands, bf16
    # layer-1 storage and an approx EUP reciprocal -> loosened tolerance)
    adj = jnp.zeros((N, N), jnp.float32).at[dst, src].set(1.0)
    adj = adj.at[s, s].set(1.0)
    mu_ref, ls_ref = reference_forward(x, adj, params, hid_dim, lat_dim, heads1)
    assert mu.shape == (N, lat_dim) and logstd.shape == (N, lat_dim)
    assert jnp.allclose(mu, mu_ref, atol=3e-2, rtol=3e-2), "mu mismatch"
    assert jnp.allclose(logstd, ls_ref, atol=3e-2, rtol=3e-2), "logstd mismatch"

    print("KERNEL_OK")
</pallas_src>

<mosaic_0001>
module attributes {stable_mosaic.version = 11 : i64} {
  func.func @_gat_project_kernel(%arg0: i32, %arg1: memref<256x8xf32, #tpu.memory_space<vmem>>, %arg2: memref<8x512xbf16, #tpu.memory_space<vmem>>, %arg3: memref<8x128xbf16, #tpu.memory_space<vmem>>, %arg4: memref<256x512xbf16, #tpu.memory_space<vmem>>, %arg5: memref<256x128xf32, #tpu.memory_space<vmem>>) attributes {dimension_semantics = [#tpu.dimension_semantics<parallel>], iteration_bounds = array<i64: 1>, scalar_prefetch = 0 : i64, scratch_operands = 0 : i64, tpu.core_type = #tpu.core_type<tc>, window_params = [{transform_indices = @transform_0, window_bounds = array<i64: 256, 8>}, {pipeline_mode = #tpu.pipeline_mode<synchronous>, transform_indices = @transform_1, window_bounds = array<i64: 8, 512>}, {pipeline_mode = #tpu.pipeline_mode<synchronous>, transform_indices = @transform_2, window_bounds = array<i64: 8, 128>}, {transform_indices = @transform_3, window_bounds = array<i64: 256, 512>}, {transform_indices = @transform_4, window_bounds = array<i64: 256, 128>}]} {
    %c0 = arith.constant 0 : index
    %c0_0 = arith.constant 0 : index
    %0 = vector.load %arg1[%c0, %c0_0] : memref<256x8xf32, #tpu.memory_space<vmem>>, vector<256x8xf32>
    %1 = arith.truncf %0 : vector<256x8xf32> to vector<256x8xbf16>
    %c0_1 = arith.constant 0 : index
    %c0_2 = arith.constant 0 : index
    %2 = vector.load %arg2[%c0_1, %c0_2] : memref<8x512xbf16, #tpu.memory_space<vmem>>, vector<8x512xbf16>
    %cst = arith.constant dense<0.000000e+00> : vector<256x512xf32>
    %3 = tpu.matmul %1, %2, %cst {dimension_numbers = #tpu.dot_dimension_numbers<[1], [0], [0], [1], [0, 0, 1, 1], [], []>} : vector<256x8xbf16>, vector<8x512xbf16>, vector<256x512xf32> -> vector<256x512xf32>
    %4 = arith.truncf %3 : vector<256x512xf32> to vector<256x512xbf16>
    %c0_3 = arith.constant 0 : index
    %c0_4 = arith.constant 0 : index
    %5 = vector.load %arg4[%c0_3, %c0_4] : memref<256x512xbf16, #tpu.memory_space<vmem>>, vector<256x512xbf16>
    tpu.vector_store %arg4[%c0_3, %c0_4], %4 {strides = array<i32>} : memref<256x512xbf16, #tpu.memory_space<vmem>>, vector<256x512xbf16>,
    %c0_5 = arith.constant 0 : index
    %c0_6 = arith.constant 0 : index
    %6 = vector.load %arg3[%c0_5, %c0_6] : memref<8x128xbf16, #tpu.memory_space<vmem>>, vector<8x128xbf16>
    %cst_7 = arith.constant dense<0.000000e+00> : vector<256x128xf32>
    %7 = tpu.matmul %1, %6, %cst_7 {dimension_numbers = #tpu.dot_dimension_numbers<[1], [0], [0], [1], [0, 0, 1, 1], [], []>} : vector<256x8xbf16>, vector<8x128xbf16>, vector<256x128xf32> -> vector<256x128xf32>
    %c0_8 = arith.constant 0 : index
    %c0_9 = arith.constant 0 : index
    %8 = vector.load %arg5[%c0_8, %c0_9] : memref<256x128xf32, #tpu.memory_space<vmem>>, vector<256x128xf32>
    tpu.vector_store %arg5[%c0_8, %c0_9], %7 {strides = array<i32>} : memref<256x128xf32, #tpu.memory_space<vmem>>, vector<256x128xf32>,
    return
  }
  func.func @transform_0(%arg0: i32) -> (i32, i32) {
    %c0_i32 = arith.constant 0 : i32
    %c0_i32_0 = arith.constant 0 : i32
    return %arg0, %c0_i32 : i32, i32
  }
  func.func @transform_1(%arg0: i32) -> (i32, i32) {
    %c0_i32 = arith.constant 0 : i32
    %c0_i32_0 = arith.constant 0 : i32
    %c0_i32_1 = arith.constant 0 : i32
    return %c0_i32, %c0_i32_0 : i32, i32
  }
  func.func @transform_2(%arg0: i32) -> (i32, i32) {
    %c0_i32 = arith.constant 0 : i32
    %c0_i32_0 = arith.constant 0 : i32
    %c0_i32_1 = arith.constant 0 : i32
    return %c0_i32, %c0_i32_0 : i32, i32
  }
  func.func @transform_3(%arg0: i32) -> (i32, i32) {
    %c0_i32 = arith.constant 0 : i32
    %c0_i32_0 = arith.constant 0 : i32
    return %arg0, %c0_i32 : i32, i32
  }
  func.func @transform_4(%arg0: i32) -> (i32, i32) {
    %c0_i32 = arith.constant 0 : i32
    %c0_i32_0 = arith.constant 0 : i32
    return %arg0, %c0_i32 : i32, i32
  }
}

</mosaic_0001>

<llo_original>
// kernel: tpu_custom_call.1
$region0: #{tpu_custom_call.1}
  #allocation0 [shape = 'u32[]', space=smem, size = 0x4, offset = 0x4, fixed_abs, tag = 'smem constant byte address 0x4 - core index']
  #allocation1 [shape = 'u32[72,128]{1,0:T(1,128)}', space=vmem, size = 0x9000, scoped, tag = 'internal scratch']
  %s0 = inlined_call_operand.vmem [shape: f32[256,8], index: 0, kind: input, shape index: {}]
  %s1 = inlined_call_operand.vmem [shape: bf16[8,512], index: 1, kind: input, shape index: {}]
  %s2 = inlined_call_operand.vmem [shape: bf16[8,128], index: 2, kind: input, shape index: {}]
  %s3 = inlined_call_operand.hbm [shape: bf16[256,512], index: 3, kind: output, shape index: {0}]
  %s4 = inlined_call_operand.hbm [shape: f32[256,128], index: 4, kind: output, shape index: {1}]
  %5 = xla_tuple %s3, %s4
  %s6 = sld [smem:[#allocation0]]
  $region30: #{tpu_custom_call.1} parent=0
    _
  %s8 = ssub.s32 1, %s6
  %s9 = scalar_select 0, %s8, %s6
  $region1: #{tpu_custom_call.1} parent=0
    #allocation2 [shape = 'u8[262144]{0}', space=vmem, size = 0x40000, scoped, tag = 'output window, operand 0, single buffered']
    #allocation3 [shape = 's32[1]{0}', space=sflag, size = 0x4, scoped, tag = 'scoped memory for tpu_custom_call.1']
    #allocation4 [shape = 'u8[131072]{0}', space=vmem, size = 0x20000, scoped, tag = 'output window, operand 1, single buffered']
    #allocation5 [shape = 's32[1]{0}', space=sflag, size = 0x4, scoped, tag = 'scoped memory for tpu_custom_call.1']
    %10 = vsyncpa [#allocation3], 0
    %11 = vsyncpa [#allocation5], 0
    // Predicated region
    $region2: #{tpu_custom_call.1} parent=1 // pred_check
      _
    $region3: #{tpu_custom_call.1} parent=1 // pred_check_branch
      %13 = sbr.rel (0) target = $region5
    $region4: #{tpu_custom_call.1} parent=1 // pred_region
      _
    $region5: #{tpu_custom_call.1} parent=1 // pred_fallthru
      _
    // Predicated region
    $region6: #{tpu_custom_call.1} parent=1 // pred_check
      _
    $region7: #{tpu_custom_call.1} parent=1 // pred_check_branch
      %15 = sbr.rel (0) target = $region9
    $region8: #{tpu_custom_call.1} parent=1 // pred_region
      _
    $region9: #{tpu_custom_call.1} parent=1 // pred_fallthru
      _
    // Predicated region
    $region10: #{tpu_custom_call.1} parent=1 // pred_check
      _
    $region11: #{tpu_custom_call.1} parent=1 // pred_check_branch
      %17 = sbr.rel (0) target = $region13
    $region12: #{tpu_custom_call.1} parent=1 // pred_region
      _
    $region13: #{tpu_custom_call.1} parent=1 // pred_fallthru
      _
    %v19 = vld [vmem:[%s0] sm:$0xff]
    %v20 = vld [vmem:[%s0 + $0x8] sm:$0xff]
    %v21 = vld [vmem:[%s0 + $0x10] sm:$0xff]
    %v22 = vld [vmem:[%s0 + $0x18] sm:$0xff]
    %v23 = vld [vmem:[%s0 + $0x20] sm:$0xff]
    %v24 = vld [vmem:[%s0 + $0x28] sm:$0xff]
    %v25 = vld [vmem:[%s0 + $0x30] sm:$0xff]
    %v26 = vld [vmem:[%s0 + $0x38] sm:$0xff]
    %v27 = vld [vmem:[%s0 + $0x40] sm:$0xff]
    %v28 = vld [vmem:[%s0 + $0x48] sm:$0xff]
    %v29 = vld [vmem:[%s0 + $0x50] sm:$0xff]
    %v30 = vld [vmem:[%s0 + $0x58] sm:$0xff]
    %v31 = vld [vmem:[%s0 + $0x60] sm:$0xff]
    %v32 = vld [vmem:[%s0 + $0x68] sm:$0xff]
    %v33 = vld [vmem:[%s0 + $0x70] sm:$0xff]
    %v34 = vld [vmem:[%s0 + $0x78] sm:$0xff]
    %v35 = vld [vmem:[%s0 + $0x80] sm:$0xff]
    %v36 = vld [vmem:[%s0 + $0x88] sm:$0xff]
    %v37 = vld [vmem:[%s0 + $0x90] sm:$0xff]
    %v38 = vld [vmem:[%s0 + $0x98] sm:$0xff]
    %v39 = vld [vmem:[%s0 + $0xa0] sm:$0xff]
    %v40 = vld [vmem:[%s0 + $0xa8] sm:$0xff]
    %v41 = vld [vmem:[%s0 + $0xb0] sm:$0xff]
    %v42 = vld [vmem:[%s0 + $0xb8] sm:$0xff]
    %v43 = vld [vmem:[%s0 + $0xc0] sm:$0xff]
    %v44 = vld [vmem:[%s0 + $0xc8] sm:$0xff]
    %v45 = vld [vmem:[%s0 + $0xd0] sm:$0xff]
    %v46 = vld [vmem:[%s0 + $0xd8] sm:$0xff]
    %v47 = vld [vmem:[%s0 + $0xe0] sm:$0xff]
    %v48 = vld [vmem:[%s0 + $0xe8] sm:$0xff]
    %v49 = vld [vmem:[%s0 + $0xf0] sm:$0xff]
    %v50 = vld [vmem:[%s0 + $0xf8] sm:$0xff]
    %v51 = vpack.c.bf16 %v20, %v19
    %v52 = vpack.c.bf16 %v22, %v21
    %v53 = vpack.c.bf16 %v24, %v23
    %v54 = vpack.c.bf16 %v26, %v25
    %v55 = vpack.c.bf16 %v28, %v27
    %v56 = vpack.c.bf16 %v30, %v29
    %v57 = vpack.c.bf16 %v32, %v31
    %v58 = vpack.c.bf16 %v34, %v33
    %v59 = vpack.c.bf16 %v36, %v35
    %v60 = vpack.c.bf16 %v38, %v37
    %v61 = vpack.c.bf16 %v40, %v39
    %v62 = vpack.c.bf16 %v42, %v41
    %v63 = vpack.c.bf16 %v44, %v43
    %v64 = vpack.c.bf16 %v46, %v45
    %v65 = vpack.c.bf16 %v48, %v47
    %v66 = vpack.c.bf16 %v50, %v49
    %v67 = vld [vmem:[%s1] sm:$0xff]
    %v68 = vld [vmem:[%s1 + $0x8] sm:$0xff]
    %v71 = vunpack.c.l.b16 %v67
    %v72 = vunpack.c.h.b16 %v67
    %v73 = vunpack.c.l.b16 %v68
    %v74 = vunpack.c.h.b16 %v68
    %v75 = vpack.c.b16 %v71, %v71
    %v76 = vpack.c.b16 %v72, %v72
    %v77 = vpack.c.b16 %v73, %v73
    %v78 = vpack.c.b16 %v74, %v74
    %vm79 = vcmask 64512
    %v81 = vsel %vm79, %v51, 0
    %v84 = vsel %vm79, %v52, 0
    %v87 = vsel %vm79, %v53, 0
    %v90 = vsel %vm79, %v54, 0
    %v93 = vsel %vm79, %v55, 0
    %v96 = vsel %vm79, %v56, 0
    %v99 = vsel %vm79, %v57, 0
    %v102 = vsel %vm79, %v58, 0
    %v105 = vsel %vm79, %v59, 0
    %v108 = vsel %vm79, %v60, 0
    %v111 = vsel %vm79, %v61, 0
    %v114 = vsel %vm79, %v62, 0
    %v117 = vsel %vm79, %v63, 0
    %v120 = vsel %vm79, %v64, 0
    %v123 = vsel %vm79, %v65, 0
    %v126 = vsel %vm79, %v66, 0
    %vm128 = vcmask 1043456
    %v130 = vsel %vm128, %v75, 0
    %v133 = vsel %vm128, %v76, 0
    %v136 = vsel %vm128, %v77, 0
    %v139 = vsel %vm128, %v78, 0
    %141 = vmatpush.bf16.msra.mxu0 0
    %142 = vmatpush.bf16.msra.mxu0 0
    %143 = vmatpush.bf16.msra.mxu0 0
    %144 = vmatpush.bf16.msra.mxu0 0
    %145 = vmatpush.bf16.msra.mxu0 0
    %146 = vmatpush.bf16.msra.mxu0 0
    %147 = vmatpush.bf16.msra.mxu0 0
    %148 = vmatpush.bf16.msra.mxu0 %v130
    %149 = vmatmul.bf16.gmra.mxu0 %v81
    %v150 = vpop.f32.mrf.mxu0
    %v151 = vadd.f32 0.0, %v150
    %v152 = vpop.f32.mrf.mxu0
    %v153 = vadd.f32 0.0, %v152
    %154 = vmatmul.bf16.gmra.mxu0 %v84
    %v155 = vpop.f32.mrf.mxu0
    %v156 = vadd.f32 0.0, %v155
    %v157 = vpop.f32.mrf.mxu0
    %v158 = vadd.f32 0.0, %v157
    %159 = vmatmul.bf16.gmra.mxu0 %v87
    %v160 = vpop.f32.mrf.mxu0
    %v161 = vadd.f32 0.0, %v160
    %v162 = vpop.f32.mrf.mxu0
    %v163 = vadd.f32 0.0, %v162
    %164 = vmatmul.bf16.gmra.mxu0 %v90
    %v165 = vpop.f32.mrf.mxu0
    %v166 = vadd.f32 0.0, %v165
    %v167 = vpop.f32.mrf.mxu0
    %v168 = vadd.f32 0.0, %v167
    %169 = vmatmul.bf16.gmra.mxu0 %v93
    %v170 = vpop.f32.mrf.mxu0
    %v171 = vadd.f32 0.0, %v170
    %v172 = vpop.f32.mrf.mxu0
    %v173 = vadd.f32 0.0, %v172
    %174 = vmatmul.bf16.gmra.mxu0 %v96
    %v175 = vpop.f32.mrf.mxu0
    %v176 = vadd.f32 0.0, %v175
    %v177 = vpop.f32.mrf.mxu0
    %v178 = vadd.f32 0.0, %v177
    %179 = vmatmul.bf16.gmra.mxu0 %v99
    %v180 = vpop.f32.mrf.mxu0
    %v181 = vadd.f32 0.0, %v180
    %v182 = vpop.f32.mrf.mxu0
    %v183 = vadd.f32 0.0, %v182
    %184 = vmatmul.bf16.gmra.mxu0 %v102
    %v185 = vpop.f32.mrf.mxu0
    %v186 = vadd.f32 0.0, %v185
    %v187 = vpop.f32.mrf.mxu0
    %v188 = vadd.f32 0.0, %v187
    %189 = vmatmul.bf16.gmra.mxu0 %v105
    %v190 = vpop.f32.mrf.mxu0
    %v191 = vadd.f32 0.0, %v190
    %v192 = vpop.f32.mrf.mxu0
    %v193 = vadd.f32 0.0, %v192
    %194 = vmatmul.bf16.gmra.mxu0 %v108
    %v195 = vpop.f32.mrf.mxu0
    %v196 = vadd.f32 0.0, %v195
    %v197 = vpop.f32.mrf.mxu0
    %v198 = vadd.f32 0.0, %v197
    %199 = vmatmul.bf16.gmra.mxu0 %v111
    %v200 = vpop.f32.mrf.mxu0
    %v201 = vadd.f32 0.0, %v200
    %v202 = vpop.f32.mrf.mxu0
    %v203 = vadd.f32 0.0, %v202
    %204 = vmatmul.bf16.gmra.mxu0 %v114
    %v205 = vpop.f32.mrf.mxu0
    %v206 = vadd.f32 0.0, %v205
    %v207 = vpop.f32.mrf.mxu0
    %v208 = vadd.f32 0.0, %v207
    %209 = vmatmul.bf16.gmra.mxu0 %v117
    %v210 = vpop.f32.mrf.mxu0
    %v211 = vadd.f32 0.0, %v210
    %v212 = vpop.f32.mrf.mxu0
    %v213 = vadd.f32 0.0, %v212
    %214 = vmatmul.bf16.gmra.mxu0 %v120
    %v215 = vpop.f32.mrf.mxu0
    %v216 = vadd.f32 0.0, %v215
    %v217 = vpop.f32.mrf.mxu0
    %v218 = vadd.f32 0.0, %v217
    %219 = vmatmul.bf16.gmra.mxu0 %v123
    %v220 = vpop.f32.mrf.mxu0
    %v221 = vadd.f32 0.0, %v220
    %v222 = vpop.f32.mrf.mxu0
    %v223 = vadd.f32 0.0, %v222
    %224 = vmatmul.bf16.gmra.mxu0 %v126
    %v225 = vpop.f32.mrf.mxu0
    %v226 = vadd.f32 0.0, %v225
    %v227 = vpop.f32.mrf.mxu0
    %v228 = vadd.f32 0.0, %v227
    %229 = vdwg.mxu0
    %230 = vmatpush.bf16.msra.mxu0 0
    %231 = vmatpush.bf16.msra.mxu0 0
    %232 = vmatpush.bf16.msra.mxu0 0
    %233 = vmatpush.bf16.msra.mxu0 0
    %234 = vmatpush.bf16.msra.mxu0 0
    %235 = vmatpush.bf16.msra.mxu0 0
    %236 = vmatpush.bf16.msra.mxu0 0
    %237 = vmatpush.bf16.msra.mxu0 %v133
    %238 = vmatmul.bf16.gmra.mxu0 %v81
    %v239 = vpop.f32.mrf.mxu0
    %v240 = vadd.f32 0.0, %v239
    %v241 = vpop.f32.mrf.mxu0
    %v242 = vadd.f32 0.0, %v241
    %243 = vmatmul.bf16.gmra.mxu0 %v84
    %v244 = vpop.f32.mrf.mxu0
    %v245 = vadd.f32 0.0, %v244
    %v246 = vpop.f32.mrf.mxu0
    %v247 = vadd.f32 0.0, %v246
    %248 = vmatmul.bf16.gmra.mxu0 %v87
    %v249 = vpop.f32.mrf.mxu0
    %v250 = vadd.f32 0.0, %v249
    %v251 = vpop.f32.mrf.mxu0
    %v252 = vadd.f32 0.0, %v251
    %253 = vmatmul.bf16.gmra.mxu0 %v90
    %v254 = vpop.f32.mrf.mxu0
    %v255 = vadd.f32 0.0, %v254
    %v256 = vpop.f32.mrf.mxu0
    %v257 = vadd.f32 0.0, %v256
    %258 = vmatmul.bf16.gmra.mxu0 %v93
    %v259 = vpop.f32.mrf.mxu0
    %v260 = vadd.f32 0.0, %v259
    %v261 = vpop.f32.mrf.mxu0
    %v262 = vadd.f32 0.0, %v261
    %263 = vmatmul.bf16.gmra.mxu0 %v96
    %v264 = vpop.f32.mrf.mxu0
    %v265 = vadd.f32 0.0, %v264
    %v266 = vpop.f32.mrf.mxu0
    %v267 = vadd.f32 0.0, %v266
    %268 = vmatmul.bf16.gmra.mxu0 %v99
    %v269 = vpop.f32.mrf.mxu0
    %v270 = vadd.f32 0.0, %v269
    %v271 = vpop.f32.mrf.mxu0
    %v272 = vadd.f32 0.0, %v271
    %273 = vmatmul.bf16.gmra.mxu0 %v102
    %v274 = vpop.f32.mrf.mxu0
    %v275 = vadd.f32 0.0, %v274
    %v276 = vpop.f32.mrf.mxu0
    %v277 = vadd.f32 0.0, %v276
    %278 = vmatmul.bf16.gmra.mxu0 %v105
    %v279 = vpop.f32.mrf.mxu0
    %v280 = vadd.f32 0.0, %v279
    %v281 = vpop.f32.mrf.mxu0
    %v282 = vadd.f32 0.0, %v281
    %283 = vmatmul.bf16.gmra.mxu0 %v108
    %v284 = vpop.f32.mrf.mxu0
    %v285 = vadd.f32 0.0, %v284
    %v286 = vpop.f32.mrf.mxu0
    %v287 = vadd.f32 0.0, %v286
    %288 = vmatmul.bf16.gmra.mxu0 %v111
    %v289 = vpop.f32.mrf.mxu0
    %v290 = vadd.f32 0.0, %v289
    %v291 = vpop.f32.mrf.mxu0
    %v292 = vadd.f32 0.0, %v291
    %293 = vmatmul.bf16.gmra.mxu0 %v114
    %v294 = vpop.f32.mrf.mxu0
    %v295 = vadd.f32 0.0, %v294
    %v296 = vpop.f32.mrf.mxu0
    %v297 = vadd.f32 0.0, %v296
    %298 = vmatmul.bf16.gmra.mxu0 %v117
    %v299 = vpop.f32.mrf.mxu0
    %v300 = vadd.f32 0.0, %v299
    %v301 = vpop.f32.mrf.mxu0
    %v302 = vadd.f32 0.0, %v301
    %303 = vmatmul.bf16.gmra.mxu0 %v120
    %v304 = vpop.f32.mrf.mxu0
    %v305 = vadd.f32 0.0, %v304
    %v306 = vpop.f32.mrf.mxu0
    %v307 = vadd.f32 0.0, %v306
    %308 = vmatmul.bf16.gmra.mxu0 %v123
    %v309 = vpop.f32.mrf.mxu0
    %v310 = vadd.f32 0.0, %v309
    %v311 = vpop.f32.mrf.mxu0
    %v312 = vadd.f32 0.0, %v311
    %313 = vmatmul.bf16.gmra.mxu0 %v126
    %v314 = vpop.f32.mrf.mxu0
    %v315 = vadd.f32 0.0, %v314
    %v316 = vpop.f32.mrf.mxu0
    %v317 = vadd.f32 0.0, %v316
    %318 = vdwg.mxu0
    %319 = vmatpush.bf16.msra.mxu0 0
    %320 = vmatpush.bf16.msra.mxu0 0
    %321 = vmatpush.bf16.msra.mxu0 0
    %322 = vmatpush.bf16.msra.mxu0 0
    %323 = vmatpush.bf16.msra.mxu0 0
    %324 = vmatpush.bf16.msra.mxu0 0
    %325 = vmatpush.bf16.msra.mxu0 0
    %326 = vmatpush.bf16.msra.mxu0 %v136
    %327 = vmatmul.bf16.gmra.mxu0 %v81
    %v328 = vpop.f32.mrf.mxu0
    %v329 = vadd.f32 0.0, %v328
    %v330 = vpop.f32.mrf.mxu0
    %v331 = vadd.f32 0.0, %v330
    %332 = vmatmul.bf16.gmra.mxu0 %v84
    %v333 = vpop.f32.mrf.mxu0
    %v334 = vadd.f32 0.0, %v333
    %v335 = vpop.f32.mrf.mxu0
    %v336 = vadd.f32 0.0, %v335
    %337 = vmatmul.bf16.gmra.mxu0 %v87
    %v338 = vpop.f32.mrf.mxu0
    %v339 = vadd.f32 0.0, %v338
    %v340 = vpop.f32.mrf.mxu0
    %v341 = vadd.f32 0.0, %v340
    %342 = vmatmul.bf16.gmra.mxu0 %v90
    %v343 = vpop.f32.mrf.mxu0
    %v344 = vadd.f32 0.0, %v343
    %v345 = vpop.f32.mrf.mxu0
    %v346 = vadd.f32 0.0, %v345
    %347 = vmatmul.bf16.gmra.mxu0 %v93
    %v348 = vpop.f32.mrf.mxu0
    %v349 = vadd.f32 0.0, %v348
    %v350 = vpop.f32.mrf.mxu0
    %v351 = vadd.f32 0.0, %v350
    %352 = vmatmul.bf16.gmra.mxu0 %v96
    %v353 = vpop.f32.mrf.mxu0
    %v354 = vadd.f32 0.0, %v353
    %v355 = vpop.f32.mrf.mxu0
    %v356 = vadd.f32 0.0, %v355
    %357 = vmatmul.bf16.gmra.mxu0 %v99
    %v358 = vpop.f32.mrf.mxu0
    %v359 = vadd.f32 0.0, %v358
    %v360 = vpop.f32.mrf.mxu0
    %v361 = vadd.f32 0.0, %v360
    %362 = vmatmul.bf16.gmra.mxu0 %v102
    %v363 = vpop.f32.mrf.mxu0
    %v364 = vadd.f32 0.0, %v363
    %v365 = vpop.f32.mrf.mxu0
    %v366 = vadd.f32 0.0, %v365
    %367 = vmatmul.bf16.gmra.mxu0 %v105
    %v368 = vpop.f32.mrf.mxu0
    %v369 = vadd.f32 0.0, %v368
    %v370 = vpop.f32.mrf.mxu0
    %v371 = vadd.f32 0.0, %v370
    %372 = vmatmul.bf16.gmra.mxu0 %v108
    %v373 = vpop.f32.mrf.mxu0
    %v374 = vadd.f32 0.0, %v373
    %v375 = vpop.f32.mrf.mxu0
    %v376 = vadd.f32 0.0, %v375
    %377 = vmatmul.bf16.gmra.mxu0 %v111
    %v378 = vpop.f32.mrf.mxu0
    %v379 = vadd.f32 0.0, %v378
    %v380 = vpop.f32.mrf.mxu0
    %v381 = vadd.f32 0.0, %v380
    %382 = vmatmul.bf16.gmra.mxu0 %v114
    %v383 = vpop.f32.mrf.mxu0
    %v384 = vadd.f32 0.0, %v383
    %v385 = vpop.f32.mrf.mxu0
    %v386 = vadd.f32 0.0, %v385
    %387 = vmatmul.bf16.gmra.mxu0 %v117
    %v388 = vpop.f32.mrf.mxu0
    %v389 = vadd.f32 0.0, %v388
    %v390 = vpop.f32.mrf.mxu0
    %v391 = vadd.f32 0.0, %v390
    %392 = vmatmul.bf16.gmra.mxu0 %v120
    %v393 = vpop.f32.mrf.mxu0
    %v394 = vadd.f32 0.0, %v393
    %v395 = vpop.f32.mrf.mxu0
    %v396 = vadd.f32 0.0, %v395
    %397 = vmatmul.bf16.gmra.mxu0 %v123
    %v398 = vpop.f32.mrf.mxu0
    %v399 = vadd.f32 0.0, %v398
    %v400 = vpop.f32.mrf.mxu0
    %v401 = vadd.f32 0.0, %v400
    %402 = vmatmul.bf16.gmra.mxu0 %v126
    %v403 = vpop.f32.mrf.mxu0
    %v404 = vadd.f32 0.0, %v403
    %v405 = vpop.f32.mrf.mxu0
    %v406 = vadd.f32 0.0, %v405
    %407 = vdwg.mxu0
    %408 = vmatpush.bf16.msra.mxu0 0
    %409 = vmatpush.bf16.msra.mxu0 0
    %410 = vmatpush.bf16.msra.mxu0 0
    %411 = vmatpush.bf16.msra.mxu0 0
    %412 = vmatpush.bf16.msra.mxu0 0
    %413 = vmatpush.bf16.msra.mxu0 0
    %414 = vmatpush.bf16.msra.mxu0 0
    %415 = vmatpush.bf16.msra.mxu0 %v139
    %416 = vmatmul.bf16.gmra.mxu0 %v81
    %v417 = vpop.f32.mrf.mxu0
    %v418 = vadd.f32 0.0, %v417
    %v419 = vpop.f32.mrf.mxu0
    %v420 = vadd.f32 0.0, %v419
    %421 = vmatmul.bf16.gmra.mxu0 %v84
    %v422 = vpop.f32.mrf.mxu0
    %v423 = vadd.f32 0.0, %v422
    %v424 = vpop.f32.mrf.mxu0
    %v425 = vadd.f32 0.0, %v424
    %426 = vmatmul.bf16.gmra.mxu0 %v87
    %v427 = vpop.f32.mrf.mxu0
    %v428 = vadd.f32 0.0, %v427
    %v429 = vpop.f32.mrf.mxu0
    %v430 = vadd.f32 0.0, %v429
    %431 = vmatmul.bf16.gmra.mxu0 %v90
    %v432 = vpop.f32.mrf.mxu0
    %v433 = vadd.f32 0.0, %v432
    %v434 = vpop.f32.mrf.mxu0
    %v435 = vadd.f32 0.0, %v434
    %436 = vmatmul.bf16.gmra.mxu0 %v93
    %v437 = vpop.f32.mrf.mxu0
    %v438 = vadd.f32 0.0, %v437
    %v439 = vpop.f32.mrf.mxu0
    %v440 = vadd.f32 0.0, %v439
    %441 = vmatmul.bf16.gmra.mxu0 %v96
    %v442 = vpop.f32.mrf.mxu0
    %v443 = vadd.f32 0.0, %v442
    %v444 = vpop.f32.mrf.mxu0
    %v445 = vadd.f32 0.0, %v444
    %446 = vmatmul.bf16.gmra.mxu0 %v99
    %v447 = vpop.f32.mrf.mxu0
    %v448 = vadd.f32 0.0, %v447
    %v449 = vpop.f32.mrf.mxu0
    %v450 = vadd.f32 0.0, %v449
    %451 = vmatmul.bf16.gmra.mxu0 %v102
    %v452 = vpop.f32.mrf.mxu0
    %v453 = vadd.f32 0.0, %v452
    %v454 = vpop.f32.mrf.mxu0
    %v455 = vadd.f32 0.0, %v454
    %456 = vmatmul.bf16.gmra.mxu0 %v105
    %v457 = vpop.f32.mrf.mxu0
    %v458 = vadd.f32 0.0, %v457
    %v459 = vpop.f32.mrf.mxu0
    %v460 = vadd.f32 0.0, %v459
    %461 = vmatmul.bf16.gmra.mxu0 %v108
    %v462 = vpop.f32.mrf.mxu0
    %v463 = vadd.f32 0.0, %v462
    %v464 = vpop.f32.mrf.mxu0
    %v465 = vadd.f32 0.0, %v464
    %466 = vmatmul.bf16.gmra.mxu0 %v111
    %v467 = vpop.f32.mrf.mxu0
    %v468 = vadd.f32 0.0, %v467
    %v469 = vpop.f32.mrf.mxu0
    %v470 = vadd.f32 0.0, %v469
    %471 = vmatmul.bf16.gmra.mxu0 %v114
    %v472 = vpop.f32.mrf.mxu0
    %v473 = vadd.f32 0.0, %v472
    %v474 = vpop.f32.mrf.mxu0
    %v475 = vadd.f32 0.0, %v474
    %476 = vmatmul.bf16.gmra.mxu0 %v117
    %v477 = vpop.f32.mrf.mxu0
    %v478 = vadd.f32 0.0, %v477
    %v479 = vpop.f32.mrf.mxu0
    %v480 = vadd.f32 0.0, %v479
    %481 = vmatmul.bf16.gmra.mxu0 %v120
    %v482 = vpop.f32.mrf.mxu0
    %v483 = vadd.f32 0.0, %v482
    %v484 = vpop.f32.mrf.mxu0
    %v485 = vadd.f32 0.0, %v484
    %486 = vmatmul.bf16.gmra.mxu0 %v123
    %v487 = vpop.f32.mrf.mxu0
    %v488 = vadd.f32 0.0, %v487
    %v489 = vpop.f32.mrf.mxu0
    %v490 = vadd.f32 0.0, %v489
    %491 = vmatmul.bf16.gmra.mxu0 %v126
    %v492 = vpop.f32.mrf.mxu0
    %v493 = vadd.f32 0.0, %v492
    %v494 = vpop.f32.mrf.mxu0
    %v495 = vadd.f32 0.0, %v494
    %496 = vdwg.mxu0
    %v497 = vpack.c.bf16 %v240, %v151
    %v498 = vpack.c.bf16 %v418, %v329
    %v499 = vpack.c.bf16 %v242, %v153
    %v500 = vpack.c.bf16 %v420, %v331
    %v501 = vpack.c.bf16 %v245, %v156
    %v502 = vpack.c.bf16 %v423, %v334
    %v503 = vpack.c.bf16 %v247, %v158
    %v504 = vpack.c.bf16 %v425, %v336
    %v505 = vpack.c.bf16 %v250, %v161
    %v506 = vpack.c.bf16 %v428, %v339
    %v507 = vpack.c.bf16 %v252, %v163
    %v508 = vpack.c.bf16 %v430, %v341
    %v509 = vpack.c.bf16 %v255, %v166
    %v510 = vpack.c.bf16 %v433, %v344
    %v511 = vpack.c.bf16 %v257, %v168
    %v512 = vpack.c.bf16 %v435, %v346
    %v513 = vpack.c.bf16 %v260, %v171
    %v514 = vpack.c.bf16 %v438, %v349
    %v515 = vpack.c.bf16 %v262, %v173
    %v516 = vpack.c.bf16 %v440, %v351
    %v517 = vpack.c.bf16 %v265, %v176
    %v518 = vpack.c.bf16 %v443, %v354
    %v519 = vpack.c.bf16 %v267, %v178
    %v520 = vpack.c.bf16 %v445, %v356
    %v521 = vpack.c.bf16 %v270, %v181
    %v522 = vpack.c.bf16 %v448, %v359
    %v523 = vpack.c.bf16 %v272, %v183
    %v524 = vpack.c.bf16 %v450, %v361
    %v525 = vpack.c.bf16 %v275, %v186
    %v526 = vpack.c.bf16 %v453, %v364
    %v527 = vpack.c.bf16 %v277, %v188
    %v528 = vpack.c.bf16 %v455, %v366
    %v529 = vpack.c.bf16 %v280, %v191
    %v530 = vpack.c.bf16 %v458, %v369
    %v531 = vpack.c.bf16 %v282, %v193
    %v532 = vpack.c.bf16 %v460, %v371
    %v533 = vpack.c.bf16 %v285, %v196
    %v534 = vpack.c.bf16 %v463, %v374
    %v535 = vpack.c.bf16 %v287, %v198
    %v536 = vpack.c.bf16 %v465, %v376
    %v537 = vpack.c.bf16 %v290, %v201
    %v538 = vpack.c.bf16 %v468, %v379
    %v539 = vpack.c.bf16 %v292, %v203
    %v540 = vpack.c.bf16 %v470, %v381
    %v541 = vpack.c.bf16 %v295, %v206
    %v542 = vpack.c.bf16 %v473, %v384
    %v543 = vpack.c.bf16 %v297, %v208
    %v544 = vpack.c.bf16 %v475, %v386
    %v545 = vpack.c.bf16 %v300, %v211
    %v546 = vpack.c.bf16 %v478, %v389
    %v547 = vpack.c.bf16 %v302, %v213
    %v548 = vpack.c.bf16 %v480, %v391
    %v549 = vpack.c.bf16 %v305, %v216
    %v550 = vpack.c.bf16 %v483, %v394
    %v551 = vpack.c.bf16 %v307, %v218
    %v552 = vpack.c.bf16 %v485, %v396
    %v553 = vpack.c.bf16 %v310, %v221
    %v554 = vpack.c.bf16 %v488, %v399
    %v555 = vpack.c.bf16 %v312, %v223
    %v556 = vpack.c.bf16 %v490, %v401
    %v557 = vpack.c.bf16 %v315, %v226
    %v558 = vpack.c.bf16 %v493, %v404
    %v559 = vpack.c.bf16 %v317, %v228
    %v560 = vpack.c.bf16 %v495, %v406
    %561 = vst [vmem:[#allocation2] sm:$0xff] %v497
    %562 = vst [vmem:[#allocation2 + $0x8] sm:$0xff] %v498
    %563 = vst [vmem:[#allocation2 + $0x10] sm:$0xff] %v499
    %564 = vst [vmem:[#allocation2 + $0x18] sm:$0xff] %v500
    %565 = vst [vmem:[#allocation2 + $0x20] sm:$0xff] %v501
    %566 = vst [vmem:[#allocation2 + $0x28] sm:$0xff] %v502
    %567 = vst [vmem:[#allocation2 + $0x30] sm:$0xff] %v503
    %568 = vst [vmem:[#allocation2 + $0x38] sm:$0xff] %v504
    %569 = vst [vmem:[#allocation2 + $0x40] sm:$0xff] %v505
    %570 = vst [vmem:[#allocation2 + $0x48] sm:$0xff] %v506
    %571 = vst [vmem:[#allocation2 + $0x50] sm:$0xff] %v507
    %572 = vst [vmem:[#allocation2 + $0x58] sm:$0xff] %v508
    %573 = vst [vmem:[#allocation2 + $0x60] sm:$0xff] %v509
    %574 = vst [vmem:[#allocation2 + $0x68] sm:$0xff] %v510
    %575 = vst [vmem:[#allocation2 + $0x70] sm:$0xff] %v511
    %576 = vst [vmem:[#allocation2 + $0x78] sm:$0xff] %v512
    %577 = vst [vmem:[#allocation2 + $0x80] sm:$0xff] %v513
    %578 = vst [vmem:[#allocation2 + $0x88] sm:$0xff] %v514
    %579 = vst [vmem:[#allocation2 + $0x90] sm:$0xff] %v515
    %580 = vst [vmem:[#allocation2 + $0x98] sm:$0xff] %v516
    %581 = vst [vmem:[#allocation2 + $0xa0] sm:$0xff] %v517
    %582 = vst [vmem:[#allocation2 + $0xa8] sm:$0xff] %v518
    %583 = vst [vmem:[#allocation2 + $0xb0] sm:$0xff] %v519
    %584 = vst [vmem:[#allocation2 + $0xb8] sm:$0xff] %v520
    %585 = vst [vmem:[#allocation2 + $0xc0] sm:$0xff] %v521
    %586 = vst [vmem:[#allocation2 + $0xc8] sm:$0xff] %v522
    %587 = vst [vmem:[#allocation2 + $0xd0] sm:$0xff] %v523
    %588 = vst [vmem:[#allocation2 + $0xd8] sm:$0xff] %v524
    %589 = vst [vmem:[#allocation2 + $0xe0] sm:$0xff] %v525
    %590 = vst [vmem:[#allocation2 + $0xe8] sm:$0xff] %v526
    %591 = vst [vmem:[#allocation2 + $0xf0] sm:$0xff] %v527
    %592 = vst [vmem:[#allocation2 + $0xf8] sm:$0xff] %v528
    %593 = vst [vmem:[#allocation2 + $0x100] sm:$0xff] %v529
    %594 = vst [vmem:[#allocation2 + $0x108] sm:$0xff] %v530
    %595 = vst [vmem:[#allocation2 + $0x110] sm:$0xff] %v531
    %596 = vst [vmem:[#allocation2 + $0x118] sm:$0xff] %v532
    %597 = vst [vmem:[#allocation2 + $0x120] sm:$0xff] %v533
    %598 = vst [vmem:[#allocation2 + $0x128] sm:$0xff] %v534
    %599 = vst [vmem:[#allocation2 + $0x130] sm:$0xff] %v535
    %600 = vst [vmem:[#allocation2 + $0x138] sm:$0xff] %v536
    %601 = vst [vmem:[#allocation2 + $0x140] sm:$0xff] %v537
    %602 = vst [vmem:[#allocation2 + $0x148] sm:$0xff] %v538
    %603 = vst [vmem:[#allocation2 + $0x150] sm:$0xff] %v539
    %604 = vst [vmem:[#allocation2 + $0x158] sm:$0xff] %v540
    %605 = vst [vmem:[#allocation2 + $0x160] sm:$0xff] %v541
    %606 = vst [vmem:[#allocation2 + $0x168] sm:$0xff] %v542
    %607 = vst [vmem:[#allocation2 + $0x170] sm:$0xff] %v543
    %608 = vst [vmem:[#allocation2 + $0x178] sm:$0xff] %v544
    %609 = vst [vmem:[#allocation2 + $0x180] sm:$0xff] %v545
    %610 = vst [vmem:[#allocation2 + $0x188] sm:$0xff] %v546
    %611 = vst [vmem:[#allocation2 + $0x190] sm:$0xff] %v547
    %612 = vst [vmem:[#allocation2 + $0x198] sm:$0xff] %v548
    %613 = vst [vmem:[#allocation2 + $0x1a0] sm:$0xff] %v549
    %614 = vst [vmem:[#allocation2 + $0x1a8] sm:$0xff] %v550
    %615 = vst [vmem:[#allocation2 + $0x1b0] sm:$0xff] %v551
    %616 = vst [vmem:[#allocation2 + $0x1b8] sm:$0xff] %v552
    %617 = vst [vmem:[#allocation2 + $0x1c0] sm:$0xff] %v553
    %618 = vst [vmem:[#allocation2 + $0x1c8] sm:$0xff] %v554
    %619 = vst [vmem:[#allocation2 + $0x1d0] sm:$0xff] %v555
    %620 = vst [vmem:[#allocation2 + $0x1d8] sm:$0xff] %v556
    %621 = vst [vmem:[#allocation2 + $0x1e0] sm:$0xff] %v557
    %622 = vst [vmem:[#allocation2 + $0x1e8] sm:$0xff] %v558
    %623 = vst [vmem:[#allocation2 + $0x1f0] sm:$0xff] %v559
    %624 = vst [vmem:[#allocation2 + $0x1f8] sm:$0xff] %v560
    %v625 = vld [vmem:[%s2] sm:$0xf]
    %v627 = vsel %vm128, %v625, 0
    %629 = vmatpush.bf16.msra.mxu0 0
    %630 = vmatpush.bf16.msra.mxu0 0
    %631 = vmatpush.bf16.msra.mxu0 0
    %632 = vmatpush.bf16.msra.mxu0 0
    %633 = vmatpush.bf16.msra.mxu0 0
    %634 = vmatpush.bf16.msra.mxu0 0
    %635 = vmatpush.bf16.msra.mxu0 0
    %636 = vmatpush.bf16.msra.mxu0 %v627
    %637 = vmatmul.bf16.gmra.mxu0 %v81
    %v638 = vpop.f32.mrf.mxu0
    %v639 = vadd.f32 0.0, %v638
    %v640 = vpop.f32.mrf.mxu0
    %v641 = vadd.f32 0.0, %v640
    %642 = vmatmul.bf16.gmra.mxu0 %v84
    %v643 = vpop.f32.mrf.mxu0
    %v644 = vadd.f32 0.0, %v643
    %v645 = vpop.f32.mrf.mxu0
    %v646 = vadd.f32 0.0, %v645
    %647 = vmatmul.bf16.gmra.mxu0 %v87
    %v648 = vpop.f32.mrf.mxu0
    %v649 = vadd.f32 0.0, %v648
    %v650 = vpop.f32.mrf.mxu0
    %v651 = vadd.f32 0.0, %v650
    %652 = vmatmul.bf16.gmra.mxu0 %v90
    %v653 = vpop.f32.mrf.mxu0
    %v654 = vadd.f32 0.0, %v653
    %v655 = vpop.f32.mrf.mxu0
    %v656 = vadd.f32 0.0, %v655
    %657 = vmatmul.bf16.gmra.mxu0 %v93
    %v658 = vpop.f32.mrf.mxu0
    %v659 = vadd.f32 0.0, %v658
    %v660 = vpop.f32.mrf.mxu0
    %v661 = vadd.f32 0.0, %v660
    %662 = vmatmul.bf16.gmra.mxu0 %v96
    %v663 = vpop.f32.mrf.mxu0
    %v664 = vadd.f32 0.0, %v663
    %v665 = vpop.f32.mrf.mxu0
    %v666 = vadd.f32 0.0, %v665
    %667 = vmatmul.bf16.gmra.mxu0 %v99
    %v668 = vpop.f32.mrf.mxu0
    %v669 = vadd.f32 0.0, %v668
    %v670 = vpop.f32.mrf.mxu0
    %v671 = vadd.f32 0.0, %v670
    %672 = vmatmul.bf16.gmra.mxu0 %v102
    %v673 = vpop.f32.mrf.mxu0
    %v674 = vadd.f32 0.0, %v673
    %v675 = vpop.f32.mrf.mxu0
    %v676 = vadd.f32 0.0, %v675
    %677 = vmatmul.bf16.gmra.mxu0 %v105
    %v678 = vpop.f32.mrf.mxu0
    %v679 = vadd.f32 0.0, %v678
    %v680 = vpop.f32.mrf.mxu0
    %v681 = vadd.f32 0.0, %v680
    %682 = vmatmul.bf16.gmra.mxu0 %v108
    %v683 = vpop.f32.mrf.mxu0
    %v684 = vadd.f32 0.0, %v683
    %v685 = vpop.f32.mrf.mxu0
    %v686 = vadd.f32 0.0, %v685
    %687 = vmatmul.bf16.gmra.mxu0 %v111
    %v688 = vpop.f32.mrf.mxu0
    %v689 = vadd.f32 0.0, %v688
    %v690 = vpop.f32.mrf.mxu0
    %v691 = vadd.f32 0.0, %v690
    %692 = vmatmul.bf16.gmra.mxu0 %v114
    %v693 = vpop.f32.mrf.mxu0
    %v694 = vadd.f32 0.0, %v693
    %v695 = vpop.f32.mrf.mxu0
    %v696 = vadd.f32 0.0, %v695
    %697 = vmatmul.bf16.gmra.mxu0 %v117
    %v698 = vpop.f32.mrf.mxu0
    %v699 = vadd.f32 0.0, %v698
    %v700 = vpop.f32.mrf.mxu0
    %v701 = vadd.f32 0.0, %v700
    %702 = vmatmul.bf16.gmra.mxu0 %v120
    %v703 = vpop.f32.mrf.mxu0
    %v704 = vadd.f32 0.0, %v703
    %v705 = vpop.f32.mrf.mxu0
    %v706 = vadd.f32 0.0, %v705
    %707 = vmatmul.bf16.gmra.mxu0 %v123
    %v708 = vpop.f32.mrf.mxu0
    %v709 = vadd.f32 0.0, %v708
    %v710 = vpop.f32.mrf.mxu0
    %v711 = vadd.f32 0.0, %v710
    %712 = vmatmul.bf16.gmra.mxu0 %v126
    %v713 = vpop.f32.mrf.mxu0
    %v714 = vadd.f32 0.0, %v713
    %v715 = vpop.f32.mrf.mxu0
    %v716 = vadd.f32 0.0, %v715
    %717 = vdwg.mxu0
    %718 = vst [vmem:[#allocation4] sm:$0xff] %v639
    %719 = vst [vmem:[#allocation4 + $0x8] sm:$0xff] %v641
    %720 = vst [vmem:[#allocation4 + $0x10] sm:$0xff] %v644
    %721 = vst [vmem:[#allocation4 + $0x18] sm:$0xff] %v646
    %722 = vst [vmem:[#allocation4 + $0x20] sm:$0xff] %v649
    %723 = vst [vmem:[#allocation4 + $0x28] sm:$0xff] %v651
    %724 = vst [vmem:[#allocation4 + $0x30] sm:$0xff] %v654
    %725 = vst [vmem:[#allocation4 + $0x38] sm:$0xff] %v656
    %726 = vst [vmem:[#allocation4 + $0x40] sm:$0xff] %v659
    %727 = vst [vmem:[#allocation4 + $0x48] sm:$0xff] %v661
    %728 = vst [vmem:[#allocation4 + $0x50] sm:$0xff] %v664
    %729 = vst [vmem:[#allocation4 + $0x58] sm:$0xff] %v666
    %730 = vst [vmem:[#allocation4 + $0x60] sm:$0xff] %v669
    %731 = vst [vmem:[#allocation4 + $0x68] sm:$0xff] %v671
    %732 = vst [vmem:[#allocation4 + $0x70] sm:$0xff] %v674
    %733 = vst [vmem:[#allocation4 + $0x78] sm:$0xff] %v676
    %734 = vst [vmem:[#allocation4 + $0x80] sm:$0xff] %v679
    %735 = vst [vmem:[#allocation4 + $0x88] sm:$0xff] %v681
    %736 = vst [vmem:[#allocation4 + $0x90] sm:$0xff] %v684
    %737 = vst [vmem:[#allocation4 + $0x98] sm:$0xff] %v686
    %738 = vst [vmem:[#allocation4 + $0xa0] sm:$0xff] %v689
    %739 = vst [vmem:[#allocation4 + $0xa8] sm:$0xff] %v691
    %740 = vst [vmem:[#allocation4 + $0xb0] sm:$0xff] %v694
    %741 = vst [vmem:[#allocation4 + $0xb8] sm:$0xff] %v696
    %742 = vst [vmem:[#allocation4 + $0xc0] sm:$0xff] %v699
    %743 = vst [vmem:[#allocation4 + $0xc8] sm:$0xff] %v701
    %744 = vst [vmem:[#allocation4 + $0xd0] sm:$0xff] %v704
    %745 = vst [vmem:[#allocation4 + $0xd8] sm:$0xff] %v706
    %746 = vst [vmem:[#allocation4 + $0xe0] sm:$0xff] %v709
    %747 = vst [vmem:[#allocation4 + $0xe8] sm:$0xff] %v711
    %748 = vst [vmem:[#allocation4 + $0xf0] sm:$0xff] %v714
    %749 = vst [vmem:[#allocation4 + $0xf8] sm:$0xff] %v716
    // Predicated region
    $region14: #{tpu_custom_call.1} parent=1 // pred_check
      _
    $region15: #{tpu_custom_call.1} parent=1 // pred_check_branch
      %751 = sbr.rel (0) target = $region17
    $region16: #{tpu_custom_call.1} parent=1 // pred_region
      %753 = vsyncadd [#allocation3], 0
      %s754 = sshll.u32 [#allocation2], 4
      %s755 = int_to_ptr.vmem [resolvable:$true] %s754
      %s756 = sshll.u32 %s3, 4
      %s757 = int_to_ptr.hbm [resolvable:$true] %s756
      %762 = dma.vmem_to_hbm [thread:$0]  %s755, 8192, %s757, [#allocation3], 256, 256, 16
    $region17: #{tpu_custom_call.1} parent=1 // pred_fallthru
      _
    // Predicated region
    $region18: #{tpu_custom_call.1} parent=1 // pred_check
      _
    $region19: #{tpu_custom_call.1} parent=1 // pred_check_branch
      %764 = sbr.rel (0) target = $region21
    $region20: #{tpu_custom_call.1} parent=1 // pred_region
      %766 = vsyncadd [#allocation5], 0
      %s767 = sshll.u32 [#allocation4], 4
      %s768 = int_to_ptr.vmem [resolvable:$true] %s767
      %s769 = sshll.u32 %s4, 4
      %s770 = int_to_ptr.hbm [resolvable:$true] %s769
      %775 = dma.vmem_to_hbm [thread:$0]  %s768, 4096, %s770, [#allocation5], 128, 128, 8
    $region21: #{tpu_custom_call.1} parent=1 // pred_fallthru
      _
    // Predicated region
    $region22: #{tpu_custom_call.1} parent=1 // pred_check
      _
    $region23: #{tpu_custom_call.1} parent=1 // pred_check_branch
      %777 = sbr.rel (0) target = $region25
    $region24: #{tpu_custom_call.1} parent=1 // pred_region
      %779 = dma.done [#allocation3], 8192
    $region25: #{tpu_custom_call.1} parent=1 // pred_fallthru
      _
    // Predicated region
    $region26: #{tpu_custom_call.1} parent=1 // pred_check
      _
    $region27: #{tpu_custom_call.1} parent=1 // pred_check_branch
      %781 = sbr.rel (0) target = $region29
    $region28: #{tpu_custom_call.1} parent=1 // pred_region
      %783 = dma.done [#allocation5], 4096
    $region29: #{tpu_custom_call.1} parent=1 // pred_fallthru
      _
    %784 = vsyncpa [#allocation3], 1
    %785 = vsyncpa [#allocation5], 1

</llo_original>
